<compile_context>
chip_gen: v7x
topology: tpu7x:2x2x1
jax: 0.10.0
libtpu: 0.0.40
codegen_flags: <defaults>
</compile_context>

<pallas_src>
import functools

import jax
import jax.numpy as jnp
from jax.experimental import pallas as pl
from jax.experimental.pallas import tpu as pltpu

BN_EPS = 1e-5
# 3x3 taps in (ky, kx) row-major order, expressed as (dy, dx) offsets.
_TAPS = tuple((ky - 1, kx - 1) for ky in range(3) for kx in range(3))


def double_conv_kernel(x_ref, mask_ref, w1_ref, g1_ref, b1_ref,
                       w2_ref, g2_ref, b2_ref, o_ref, p1_ref, p2_ref,
                       *, w, roll_sign):
    m = x_ref.shape[1]            # N*H*W flat pixel count (lane axis)
    inv_m = 1.0 / m

    def build_patches(src, p_ref):
        """Pack the 9 shifted + border-masked taps of src (C, M) into p_ref (9C, M)."""
        c = src.shape[0]
        for t, (dy, dx) in enumerate(_TAPS):
            if dy == 0 and dx == 0:
                p_ref[t * c:(t + 1) * c, :] = src
            else:
                shift = dy * w + dx                    # tap reads source lane (dest + shift)
                amt = (-roll_sign * shift) % m         # static Python int
                rolled = pltpu.roll(src, shift=amt, axis=1)   # XLU lane rotation
                p_ref[t * c:(t + 1) * c, :] = rolled * mask_ref[t:t + 1, :]

    def bn_relu(acc, g, b):
        """Training-mode BatchNorm (one-pass batch stats over lanes) + ReLU."""
        s = jnp.sum(acc, axis=1, keepdims=True)
        ss = jnp.sum(acc * acc, axis=1, keepdims=True)
        mean = s * inv_m
        var = ss * inv_m - mean * mean                 # biased variance, single pass
        scale = g * jax.lax.rsqrt(var + BN_EPS)        # rsqrt -> EUP slot
        return jnp.maximum((acc - mean) * scale + b, 0.0)

    # ---- conv1: one MXU matmul, K = 9*Cin_pad, lane-dense (Cmid_pad, M) result.
    build_patches(x_ref[...], p1_ref)
    a1 = jnp.dot(w1_ref[...], p1_ref[...], preferred_element_type=jnp.float32)
    y1 = bn_relu(a1, g1_ref[...], b1_ref[...])

    # ---- conv2: same pattern, K = 9*Cmid_pad.
    build_patches(y1, p2_ref)
    a2 = jnp.dot(w2_ref[...], p2_ref[...], preferred_element_type=jnp.float32)
    o_ref[...] = bn_relu(a2, g2_ref[...], b2_ref[...]).astype(o_ref.dtype)


@functools.lru_cache(maxsize=None)
def _pltpu_roll_matches_jnp_roll() -> bool:
    """One-time hardware probe pinning pltpu.roll's rotate direction.

    The 3x3 tap shifts require roll(x, s)[..., i] == x[..., (i - s) % L]
    (jnp.roll convention); this tiny probe guards against the underlying
    tpu.rotate convention differing across Pallas versions.
    """
    def k(x_ref, o_ref):
        o_ref[...] = pltpu.roll(x_ref[...], shift=1, axis=1)

    x = jnp.arange(8 * 128, dtype=jnp.float32).reshape(8, 128)
    vmem = pl.BlockSpec(memory_space=pltpu.MemorySpace.VMEM)
    out = pl.pallas_call(
        k, out_shape=jax.ShapeDtypeStruct((8, 128), jnp.float32),
        in_specs=[vmem], out_specs=vmem)(x)
    return bool(jnp.array_equal(out, jnp.roll(x, 1, axis=1)))


def _round_up(c, k=8):
    return (c + k - 1) // k * k


def _pack_conv_weights(w_oihw, cin_pad, cout_pad):
    """PyTorch OIHW (Cout, Cin, 3, 3) -> (Cout_pad, 9*Cin_pad), tap-major columns."""
    cout, cin = w_oihw.shape[0], w_oihw.shape[1]
    wt = jnp.transpose(w_oihw, (0, 2, 3, 1)).astype(jnp.float32)   # (Cout, ky, kx, Cin)
    wt = jnp.pad(wt, ((0, cout_pad - cout), (0, 0), (0, 0), (0, cin_pad - cin)))
    return wt.reshape(cout_pad, 9 * cin_pad)


def _pad_bn_param(v, c_pad, fill):
    v = v.astype(jnp.float32)
    return jnp.pad(v, (0, c_pad - v.shape[0]), constant_values=fill).reshape(c_pad, 1)


def _border_masks(n, h, w):
    """(9, N*H*W) f32 validity masks for the 9 conv taps (1 = in-bounds)."""
    yy, xx = jnp.meshgrid(jnp.arange(h), jnp.arange(w), indexing="ij")
    rows = []
    for dy, dx in _TAPS:
        ok = ((yy + dy >= 0) & (yy + dy < h) & (xx + dx >= 0) & (xx + dx < w))
        rows.append(jnp.broadcast_to(ok, (n, h, w)).reshape(n * h * w))
    return jnp.stack(rows).astype(jnp.float32)


@functools.partial(jax.jit, static_argnums=(7,))
def _double_conv_impl(x_nchw, w1_oihw, g1, b1, w2_oihw, g2, b2, roll_sign):
    n, cin, h, w = x_nchw.shape
    cmid = w1_oihw.shape[0]
    cout = w2_oihw.shape[0]
    m = n * h * w
    if m % 128 != 0:
        raise ValueError("N*H*W must be a multiple of 128 for this kernel")

    cin_p, cmid_p, cout_p = _round_up(cin), _round_up(cmid), _round_up(cout)

    # ---- wrapper-side layout plumbing (transposes / pads / weight packing) ----
    x_cm = jnp.transpose(x_nchw, (1, 0, 2, 3)).reshape(cin, m).astype(jnp.float32)
    x_cm = jnp.pad(x_cm, ((0, cin_p - cin), (0, 0)))
    mask = _border_masks(n, h, w)
    w1p = _pack_conv_weights(w1_oihw, cin_p, cmid_p)
    w2p = _pack_conv_weights(w2_oihw, cmid_p, cout_p)
    g1p = _pad_bn_param(g1, cmid_p, 1.0)
    b1p = _pad_bn_param(b1, cmid_p, 0.0)
    g2p = _pad_bn_param(g2, cout_p, 1.0)
    b2p = _pad_bn_param(b2, cout_p, 0.0)

    vmem = pl.BlockSpec(memory_space=pltpu.MemorySpace.VMEM)
    kernel = functools.partial(double_conv_kernel, w=w, roll_sign=roll_sign)
    # TODO(synk): at realistic DoubleConv sizes (C>=64, 64x64+ images) add a
    # row-tiled grid ("parallel" so v7x's 2 TensorCores both work) with a
    # two-pass BN reduction, bf16 activations/weights, and an explicit
    # vmem_limit_bytes; at N*H*W=512 / C<=8 the whole problem fits one core's
    # VMEM comfortably and BN's global batch statistics make a trivial grid
    # the correct choice here.
    out_cm = pl.pallas_call(
        kernel,
        out_shape=jax.ShapeDtypeStruct((cout_p, m), jnp.float32),
        in_specs=[vmem] * 8,
        out_specs=vmem,
        scratch_shapes=[pltpu.VMEM((9 * cin_p, m), jnp.float32),
                        pltpu.VMEM((9 * cmid_p, m), jnp.float32)],
    )(x_cm, mask, w1p, g1p, b1p, w2p, g2p, b2p)

    out = out_cm[:cout].reshape(cout, n, h, w)
    return jnp.transpose(out, (1, 0, 2, 3))   # back to NCHW


def double_conv(x_nchw, w1_oihw, g1, b1, w2_oihw, g2, b2):
    roll_sign = 1 if _pltpu_roll_matches_jnp_roll() else -1
    return _double_conv_impl(x_nchw, w1_oihw, g1, b1, w2_oihw, g2, b2, roll_sign)


def reference_double_conv(x_nchw, w1_oihw, g1, b1, w2_oihw, g2, b2):
    """Pure-JAX reference matching the PyTorch forward (training-mode BN)."""
    def conv(x, w):
        return jax.lax.conv_general_dilated(
            x, w, window_strides=(1, 1), padding=((1, 1), (1, 1)),
            dimension_numbers=("NCHW", "OIHW", "NCHW"))

    def bn_relu(x, g, b):
        mean = jnp.mean(x, axis=(0, 2, 3), keepdims=True)
        var = jnp.mean((x - mean) ** 2, axis=(0, 2, 3), keepdims=True)
        y = (x - mean) * jax.lax.rsqrt(var + BN_EPS)
        y = y * g.reshape(1, -1, 1, 1) + b.reshape(1, -1, 1, 1)
        return jnp.maximum(y, 0.0)

    h = bn_relu(conv(x_nchw, w1_oihw), g1, b1)
    return bn_relu(conv(h, w2_oihw), g2, b2)


if __name__ == "__main__":
    key = jax.random.PRNGKey(0)
    k1, k2, k3, k4, k5 = jax.random.split(key, 5)

    # DoubleConv(in_channels=4, out_channels=8) => mid_channels=8
    N, Cin, H, W = 2, 4, 16, 16
    Cmid = Cout = 8

    x = jax.random.normal(k1, (N, Cin, H, W), jnp.float32)
    # conv weights in PyTorch OIHW layout (bias=False in the module)
    w1 = jax.random.normal(k2, (Cmid, Cin, 3, 3), jnp.float32) * (2.0 / (Cin * 9)) ** 0.5
    w2 = jax.random.normal(k3, (Cout, Cmid, 3, 3), jnp.float32) * (2.0 / (Cmid * 9)) ** 0.5
    # BN affine params (perturbed from the default 1/0 so the path is exercised)
    g1 = 1.0 + 0.1 * jax.random.normal(k4, (Cmid,), jnp.float32)
    b1 = 0.1 * jax.random.normal(k5, (Cmid,), jnp.float32)
    g2 = jnp.ones((Cout,), jnp.float32)
    b2 = jnp.zeros((Cout,), jnp.float32)

    out = double_conv(x, w1, g1, b1, w2, g2, b2)
    out = jax.block_until_ready(out)

    ref = reference_double_conv(x, w1, g1, b1, w2, g2, b2)
    assert out.shape == (N, Cout, H, W), out.shape
    err = float(jnp.max(jnp.abs(out - ref)))
    assert jnp.allclose(out, ref, atol=2e-2, rtol=2e-2), err

    print("KERNEL_OK")
</pallas_src>

<mosaic_0001>
module attributes {stable_mosaic.version = 11 : i64} {
  func.func @k(%arg0: memref<8x128xf32, #tpu.memory_space<vmem>>, %arg1: memref<8x128xf32, #tpu.memory_space<vmem>>) attributes {dimension_semantics = [], scalar_prefetch = 0 : i64, scratch_operands = 0 : i64, tpu.core_type = #tpu.core_type<tc>} {
    %c0 = arith.constant 0 : index
    %c0_0 = arith.constant 0 : index
    %0 = vector.load %arg0[%c0, %c0_0] : memref<8x128xf32, #tpu.memory_space<vmem>>, vector<8x128xf32>
    %c1_i32 = arith.constant 1 : i32
    %1 = tpu.dynamic_rotate %0 by %c1_i32 dim 1 : vector<8x128xf32>, i32 -> vector<8x128xf32>
    %c0_1 = arith.constant 0 : index
    %c0_2 = arith.constant 0 : index
    %2 = vector.load %arg1[%c0_1, %c0_2] : memref<8x128xf32, #tpu.memory_space<vmem>>, vector<8x128xf32>
    tpu.vector_store %arg1[%c0_1, %c0_2], %1 {strides = array<i32>} : memref<8x128xf32, #tpu.memory_space<vmem>>, vector<8x128xf32>,
    return
  }
}

</mosaic_0001>

<llo_original>
// kernel: tpu_custom_call.1
$region0: #{tpu_custom_call.1}
  #allocation0 [shape = 'u32[]', space=smem, size = 0x4, offset = 0x4, fixed_abs, tag = 'smem constant byte address 0x4 - core index']
  #allocation1 [shape = 'u32[144,128]{1,0:T(1,128)}', space=vmem, size = 0x12000, scoped, tag = 'internal scratch']
  %s0 = inlined_call_operand.hbm [shape: f32[8,128], index: 0, kind: input, shape index: {}]
  %s1 = inlined_call_operand.hbm [shape: f32[8,128], index: 1, kind: output, shape index: {}]
  %s2 = sld [smem:[#allocation0]]
  $region18: #{tpu_custom_call.1} parent=0
    _
  %s4 = ssub.s32 1, %s2
  %s5 = scalar_select 0, %s4, %s2
  $region1: #{tpu_custom_call.1} parent=0
    #allocation2 [shape = 'u8[4096]{0}', space=vmem, size = 0x1000, scoped, tag = 'input window, operand 0, single buffered']
    #allocation3 [shape = 's32[1]{0}', space=sflag, size = 0x4, scoped, tag = 'scoped memory for tpu_custom_call.1']
    #allocation4 [shape = 's32[1]{0}', space=sflag, size = 0x4, scoped, tag = 'scoped memory for tpu_custom_call.1']
    #allocation5 [shape = 'u8[4096]{0}', space=vmem, size = 0x1000, scoped, tag = 'output window, operand 0, single buffered']
    %6 = vsyncpa [#allocation3], 0
    %7 = vsyncpa [#allocation4], 0
    // Predicated region
    $region2: #{tpu_custom_call.1} parent=1 // pred_check
      _
    $region3: #{tpu_custom_call.1} parent=1 // pred_check_branch
      %9 = sbr.rel (0) target = $region5
    $region4: #{tpu_custom_call.1} parent=1 // pred_region
      %s11 = ssub.s32 128, 128
      %12 = vsyncadd [#allocation3], %s11
      %s14 = sshll.u32 [#allocation2], 4
      %s15 = int_to_ptr.vmem [resolvable:$true] %s14
      %17 = dma.hbm_to_vmem [thread:$0]  %s0, 128, %s15, [#allocation3]
    $region5: #{tpu_custom_call.1} parent=1 // pred_fallthru
      _
    // Predicated region
    $region6: #{tpu_custom_call.1} parent=1 // pred_check
      _
    $region7: #{tpu_custom_call.1} parent=1 // pred_check_branch
      %19 = sbr.rel (0) target = $region9
    $region8: #{tpu_custom_call.1} parent=1 // pred_region
      %20 = dma.done [#allocation3], 128
    $region9: #{tpu_custom_call.1} parent=1 // pred_fallthru
      _
    %v21 = vld [vmem:[#allocation2] sm:$0xff]
    %22 = vrot.lane.b32.xlu0 %v21, 1
    %v23 = vpop.permute.xlu0 %22
    %24 = vst [vmem:[#allocation5] sm:$0xff] %v23
    // Predicated region
    $region10: #{tpu_custom_call.1} parent=1 // pred_check
      _
    $region11: #{tpu_custom_call.1} parent=1 // pred_check_branch
      %26 = sbr.rel (0) target = $region13
    $region12: #{tpu_custom_call.1} parent=1 // pred_region
      %s28 = ssub.s32 128, 128
      %29 = vsyncadd [#allocation4], %s28
      %s31 = sshll.u32 [#allocation5], 4
      %s32 = int_to_ptr.vmem [resolvable:$true] %s31
      %34 = dma.vmem_to_hbm [thread:$0]  %s32, 128, %s1, [#allocation4]
    $region13: #{tpu_custom_call.1} parent=1 // pred_fallthru
      _
    // Predicated region
    $region14: #{tpu_custom_call.1} parent=1 // pred_check
      _
    $region15: #{tpu_custom_call.1} parent=1 // pred_check_branch
      %36 = sbr.rel (0) target = $region17
    $region16: #{tpu_custom_call.1} parent=1 // pred_region
      %37 = dma.done [#allocation4], 128
    $region17: #{tpu_custom_call.1} parent=1 // pred_fallthru
      _
    %38 = vsyncpa [#allocation3], 1
    %39 = vsyncpa [#allocation4], 1

</llo_original>
